<compile_context>
chip_gen: v5e
topology: v5e:2x2
jax: 0.10.0
libtpu: 0.0.40
codegen_flags: <defaults>
</compile_context>

<pallas_src>
import math
import functools

import jax
import jax.numpy as jnp
import numpy as np
from jax import lax
from jax.experimental import pallas as pl
from jax.experimental.pallas import tpu as pltpu

_LANE = 128
_SUBLANE = 8
_MAX_TILE_ROWS = 4096   # (4096,128) f32 block = 2 MiB; 2 inputs x 2 bufs = 8 MiB VMEM
_CHUNK_ROWS = 64        # in-kernel fold granularity (bounds live vreg pressure)

# Lanczos approximation (g = 7, n = 9) for log-gamma, valid for z >= 0.5.
_G = 7.0
_COEF = (
    0.99999999999980993,
    676.5203681218851,
    -1259.1392167224028,
    771.32342877765313,
    -176.61502916214059,
    12.507343278686905,
    -0.13857109526572012,
    9.9843695780195716e-6,
    1.5056327351493116e-7,
)


def _round_up(a, b):
    return ((a + b - 1) // b) * b


def _zinb_kernel(x_ref, mean_ref, out_ref, *,
                 tile_rows, chunk_rows, num_tiles, valid_rows_last,
                 disp, pi, scale_factor,
                 log_disp_eps, log_disp, c_nb):
    eps = 1e-10

    def chunk_result(row_off, nrows):
        """Per-element ZINB terms for a (nrows, 128) chunk of the tile."""
        x = x_ref[pl.ds(row_off, nrows), :].astype(jnp.float32)
        mu = mean_ref[pl.ds(row_off, nrows), :].astype(jnp.float32)
        if scale_factor != 1.0:
            mu = mu * scale_factor

        # Shared log: log(disp + mean + eps) used by both t2 and zero_nb.
        log_dme = jnp.log((disp + eps) + mu)
        log_mu = jnp.log(mu + eps)

        # Fused lgamma(x+1) - lgamma(x+disp+eps) (Lanczos g=7):
        #   0.5*log(2*pi) terms cancel; the "-t" terms collapse to (disp+eps-1),
        #   which is folded into the host constant c_nb.
        lg = (x + 0.5) * jnp.log(x + (_G + 0.5)) \
            - (x + (disp + eps - 0.5)) * jnp.log(x + (disp + eps + _G - 0.5))

        # A(x+1): series-with-divides form (divides land on the EUP slot).
        a1 = _COEF[0]
        for k in range(1, len(_COEF)):
            a1 = a1 + _COEF[k] / (x + float(k))
        # A(x+disp+eps): rational, divide-free form (work stays on the VALU).
        zm1 = x + (disp + eps - 1.0)
        num = _COEF[0]
        den = 1.0
        for k in range(1, len(_COEF)):
            d = zm1 + float(k)
            num, den = num * d + _COEF[k] * den, den * d
        lg = lg + jnp.log(a1) - jnp.log(num) + jnp.log(den)

        # t2 = (disp+x)*log(1 + mean/(disp+eps)) + x*(log(disp+eps) - log(mean+eps))
        #    with log(1 + mean/(disp+eps)) == log_dme - log(disp+eps)
        t2 = (disp + x) * (log_dme - log_disp_eps) + x * (log_disp_eps - log_mu)
        nb_case = lg + t2 + c_nb

        # zero_nb = (disp/(disp+mean+eps))**disp = exp(disp*(log(disp) - log_dme))
        zero_nb = jnp.exp(disp * (log_disp - log_dme))
        zero_case = -jnp.log(pi + (1.0 - pi) * zero_nb + eps)

        return jnp.where(x <= 1e-8, zero_case, nb_case)

    def fold8(res):
        """Fold (r, 128) -> (8, 128) partial sum (short VPU add chain)."""
        acc = res[0:_SUBLANE, :]
        for k in range(1, res.shape[0] // _SUBLANE):
            acc = acc + res[k * _SUBLANE:(k + 1) * _SUBLANE, :]
        return acc

    def tile_sum(valid_rows):
        """(8,128) partial sum over the first `valid_rows` rows of this tile."""
        full_chunks = valid_rows // chunk_rows
        rem = valid_rows - full_chunks * chunk_rows
        acc = None
        if full_chunks == 1:
            acc = fold8(chunk_result(0, chunk_rows))
        elif full_chunks > 1:
            def body(c, a):
                off = pl.multiple_of(c * chunk_rows, chunk_rows)
                return a + fold8(chunk_result(off, chunk_rows))
            acc = lax.fori_loop(0, full_chunks, body,
                                jnp.zeros((_SUBLANE, _LANE), jnp.float32))
        if rem > 0:
            rem8 = _round_up(rem, _SUBLANE)
            res = chunk_result(full_chunks * chunk_rows, rem8)
            if rem8 != rem:
                # Garbage rows of a ragged last block: select (never multiply)
                # to 0 so NaN/Inf in undefined rows cannot leak into the sum.
                rid = lax.broadcasted_iota(jnp.int32, (rem8, _LANE), 0)
                res = jnp.where(rid < rem, res, 0.0)
            tail = fold8(res)
            acc = tail if acc is None else acc + tail
        return acc

    if num_tiles == 1 or valid_rows_last == tile_rows:
        # All tiles identical (and the only tile may be partial).
        out_ref[0] = tile_sum(valid_rows_last if num_tiles == 1 else tile_rows)
    else:
        i = pl.program_id(0)

        @pl.when(i < num_tiles - 1)
        def _():
            out_ref[0] = tile_sum(tile_rows)

        @pl.when(i == num_tiles - 1)
        def _():
            out_ref[0] = tile_sum(valid_rows_last)


def zinb_loss(x, mean, disp=30.0, pi=0.5, scale_factor=1.0, ridge_lambda=0.0):
    """Scalar ZINB mean loss; elementwise math + per-tile reduce in Pallas."""
    disp = float(disp)
    pi = float(pi)
    scale_factor = float(scale_factor)
    ridge_lambda = float(ridge_lambda)
    eps = 1e-10

    n = int(np.prod(x.shape))
    xf = jnp.reshape(x, (-1,))
    mf = jnp.reshape(mean, (-1,))

    rows = -(-n // _LANE)
    pad = 0
    if (n % _LANE != 0) or (rows < _SUBLANE):
        # Rare path: pad flat arrays (one copy) with benign values (x=0 ->
        # zero branch, mean=1); their exact contribution is removed below.
        rows = max(rows, _SUBLANE)
        pad = rows * _LANE - n
        xf = jnp.pad(xf, (0, pad))
        mf = jnp.pad(mf, (0, pad), constant_values=1.0)
    # Common path (n % 128 == 0): reshape is metadata-only, no HBM copy.
    x2 = xf.reshape(rows, _LANE)
    m2 = mf.reshape(rows, _LANE)

    # Tile sizing: at most _MAX_TILE_ROWS, at least 2 grid steps when possible
    # so the "parallel" axis can shard across v7x's two TensorCores.
    tile_rows = max(_SUBLANE,
                    min(_MAX_TILE_ROWS, _round_up(-(-rows // 2), _SUBLANE)))
    num_tiles = -(-rows // tile_rows)
    valid_rows_last = rows - (num_tiles - 1) * tile_rows
    chunk_rows = min(_CHUNK_ROWS, tile_rows)

    kernel = functools.partial(
        _zinb_kernel,
        tile_rows=tile_rows, chunk_rows=chunk_rows, num_tiles=num_tiles,
        valid_rows_last=valid_rows_last,
        disp=disp, pi=pi, scale_factor=scale_factor,
        log_disp_eps=float(math.log(disp + eps)),
        log_disp=float(math.log(disp)),
        # lgamma(disp+eps) + (disp+eps-1) [fused lgamma-difference constant]
        #   - log|1 - pi + eps|, all folded into one host constant.
        c_nb=float(math.lgamma(disp + eps) + (disp + eps - 1.0)
                   - math.log(abs(1.0 - pi + eps))),
    )

    blk = pl.BlockSpec((tile_rows, _LANE), lambda i: (i, 0))
    n_elems = rows * _LANE
    cost = pl.CostEstimate(
        flops=90 * n_elems,
        transcendentals=17 * n_elems,
        bytes_accessed=int(x2.size * x2.dtype.itemsize
                           + m2.size * m2.dtype.itemsize
                           + num_tiles * _SUBLANE * _LANE * 4),
    )

    partials = pl.pallas_call(
        kernel,
        out_shape=jax.ShapeDtypeStruct((num_tiles, _SUBLANE, _LANE), jnp.float32),
        grid_spec=pltpu.PrefetchScalarGridSpec(
            num_scalar_prefetch=0,
            grid=(num_tiles,),
            in_specs=[blk, blk],
            out_specs=pl.BlockSpec((1, _SUBLANE, _LANE), lambda i: (i, 0, 0)),
        ),
        compiler_params=pltpu.CompilerParams(
            dimension_semantics=("parallel",)),
        cost_estimate=cost,
    )(x2, m2)

    total = jnp.sum(partials)
    if pad:
        # Remove the padded elements' (benign: x=0, mean*sf=scale_factor)
        # zero-inflation contribution, computed exactly on the host.
        zero_nb_pad = (disp / (disp + scale_factor + eps)) ** disp
        zero_case_pad = -math.log(pi + (1.0 - pi) * zero_nb_pad + eps)
        total = total - jnp.float32(pad * zero_case_pad)

    loss = total / jnp.float32(n)
    if ridge_lambda > 0:
        # Constant added to every element == constant added once to the mean.
        loss = loss + jnp.float32(ridge_lambda * pi * pi)
    return loss


def _zinb_ref(x, mean, disp=30.0, pi=0.5, scale_factor=1.0, ridge_lambda=0.0):
    """Pure-JAX reference mirroring the PyTorch arithmetic (for checking)."""
    eps = 1e-10
    x = x.astype(jnp.float32)
    mean = mean.astype(jnp.float32) * scale_factor
    t1 = (jax.scipy.special.gammaln(jnp.float32(disp + eps))
          + jax.scipy.special.gammaln(x + 1.0)
          - jax.scipy.special.gammaln(x + disp + eps))
    t2 = (disp + x) * jnp.log(1.0 + mean / (disp + eps)) \
        + x * (jnp.log(jnp.float32(disp + eps)) - jnp.log(mean + eps))
    nb_final = t1 + t2
    nb_case = nb_final - jnp.log(jnp.abs(jnp.float32(1.0 - pi + eps)))
    zero_nb = jnp.power(disp / (disp + mean + eps), disp)
    zero_case = -jnp.log(pi + (1.0 - pi) * zero_nb + eps)
    result = jnp.where(x <= 1e-8, zero_case, nb_case)
    if ridge_lambda > 0:
        result = result + ridge_lambda * (pi ** 2)
    return jnp.mean(result)


if __name__ == "__main__":
    key = jax.random.PRNGKey(0)
    k1, k2 = jax.random.split(key)

    # NCHW inputs, like the PyTorch module would receive.
    B, C, H, W = 2, 4, 16, 16
    # x: non-negative count-like data (includes exact zeros -> zero-inflation branch)
    x = jnp.floor(jax.random.uniform(k1, (B, C, H, W), jnp.float32) * 4.0)
    # mean: strictly positive predicted means
    mean = jax.random.uniform(k2, (B, C, H, W), jnp.float32,
                              minval=0.1, maxval=3.0)

    loss = zinb_loss(x, mean, disp=30.0, pi=0.5,
                     scale_factor=1.0, ridge_lambda=0.0)
    loss = jax.block_until_ready(loss)

    ref = jax.block_until_ready(_zinb_ref(x, mean))
    np.testing.assert_allclose(np.asarray(loss), np.asarray(ref),
                               rtol=1e-2, atol=1e-2)

    print("KERNEL_OK")
</pallas_src>

<mosaic_0001>
module attributes {stable_mosaic.version = 11 : i64} {
  func.func @_zinb_kernel(%arg0: i32, %arg1: memref<8x128xf32, #tpu.memory_space<vmem>>, %arg2: memref<8x128xf32, #tpu.memory_space<vmem>>, %arg3: memref<1x8x128xf32, #tpu.memory_space<vmem>>) attributes {dimension_semantics = [#tpu.dimension_semantics<parallel>], iteration_bounds = array<i64: 2>, scalar_prefetch = 0 : i64, scratch_operands = 0 : i64, tpu.core_type = #tpu.core_type<tc>, window_params = [{transform_indices = @transform_0, window_bounds = array<i64: 8, 128>}, {transform_indices = @transform_1, window_bounds = array<i64: 8, 128>}, {transform_indices = @transform_2, window_bounds = array<i64: 1, 8, 128>}]} {
    %c0 = arith.constant 0 : index
    %c0_0 = arith.constant 0 : index
    %0 = vector.load %arg1[%c0, %c0_0] : memref<8x128xf32, #tpu.memory_space<vmem>>, vector<8x128xf32>
    %c0_1 = arith.constant 0 : index
    %c0_2 = arith.constant 0 : index
    %1 = vector.load %arg2[%c0_1, %c0_2] : memref<8x128xf32, #tpu.memory_space<vmem>>, vector<8x128xf32>
    %cst = arith.constant 3.000000e+01 : f32
    %2 = vector.broadcast %cst : f32 to vector<8x128xf32>
    %3 = arith.addf %2, %1 : vector<8x128xf32>
    %4 = math.log %3 : vector<8x128xf32>
    %cst_3 = arith.constant 1.000000e-10 : f32
    %5 = vector.broadcast %cst_3 : f32 to vector<8x128xf32>
    %6 = arith.addf %1, %5 : vector<8x128xf32>
    %7 = math.log %6 : vector<8x128xf32>
    %cst_4 = arith.constant 5.000000e-01 : f32
    %8 = vector.broadcast %cst_4 : f32 to vector<8x128xf32>
    %9 = arith.addf %0, %8 : vector<8x128xf32>
    %cst_5 = arith.constant 7.500000e+00 : f32
    %10 = vector.broadcast %cst_5 : f32 to vector<8x128xf32>
    %11 = arith.addf %0, %10 : vector<8x128xf32>
    %12 = math.log %11 : vector<8x128xf32>
    %13 = arith.mulf %9, %12 : vector<8x128xf32>
    %cst_6 = arith.constant 2.950000e+01 : f32
    %14 = vector.broadcast %cst_6 : f32 to vector<8x128xf32>
    %15 = arith.addf %0, %14 : vector<8x128xf32>
    %cst_7 = arith.constant 3.650000e+01 : f32
    %16 = vector.broadcast %cst_7 : f32 to vector<8x128xf32>
    %17 = arith.addf %0, %16 : vector<8x128xf32>
    %18 = math.log %17 : vector<8x128xf32>
    %19 = arith.mulf %15, %18 : vector<8x128xf32>
    %20 = arith.subf %13, %19 : vector<8x128xf32>
    %cst_8 = arith.constant 1.000000e+00 : f32
    %21 = vector.broadcast %cst_8 : f32 to vector<8x128xf32>
    %22 = arith.addf %0, %21 : vector<8x128xf32>
    %cst_9 = arith.constant 676.520386 : f32
    %23 = vector.broadcast %cst_9 : f32 to vector<8x128xf32>
    %24 = arith.divf %23, %22 : vector<8x128xf32>
    %cst_10 = arith.constant 1.000000e+00 : f32
    %25 = vector.broadcast %cst_10 : f32 to vector<8x128xf32>
    %26 = arith.addf %25, %24 : vector<8x128xf32>
    %cst_11 = arith.constant 2.000000e+00 : f32
    %27 = vector.broadcast %cst_11 : f32 to vector<8x128xf32>
    %28 = arith.addf %0, %27 : vector<8x128xf32>
    %cst_12 = arith.constant -1259.13916 : f32
    %29 = vector.broadcast %cst_12 : f32 to vector<8x128xf32>
    %30 = arith.divf %29, %28 : vector<8x128xf32>
    %31 = arith.addf %26, %30 : vector<8x128xf32>
    %cst_13 = arith.constant 3.000000e+00 : f32
    %32 = vector.broadcast %cst_13 : f32 to vector<8x128xf32>
    %33 = arith.addf %0, %32 : vector<8x128xf32>
    %cst_14 = arith.constant 771.323425 : f32
    %34 = vector.broadcast %cst_14 : f32 to vector<8x128xf32>
    %35 = arith.divf %34, %33 : vector<8x128xf32>
    %36 = arith.addf %31, %35 : vector<8x128xf32>
    %cst_15 = arith.constant 4.000000e+00 : f32
    %37 = vector.broadcast %cst_15 : f32 to vector<8x128xf32>
    %38 = arith.addf %0, %37 : vector<8x128xf32>
    %cst_16 = arith.constant -176.615036 : f32
    %39 = vector.broadcast %cst_16 : f32 to vector<8x128xf32>
    %40 = arith.divf %39, %38 : vector<8x128xf32>
    %41 = arith.addf %36, %40 : vector<8x128xf32>
    %cst_17 = arith.constant 5.000000e+00 : f32
    %42 = vector.broadcast %cst_17 : f32 to vector<8x128xf32>
    %43 = arith.addf %0, %42 : vector<8x128xf32>
    %cst_18 = arith.constant 12.5073433 : f32
    %44 = vector.broadcast %cst_18 : f32 to vector<8x128xf32>
    %45 = arith.divf %44, %43 : vector<8x128xf32>
    %46 = arith.addf %41, %45 : vector<8x128xf32>
    %cst_19 = arith.constant 6.000000e+00 : f32
    %47 = vector.broadcast %cst_19 : f32 to vector<8x128xf32>
    %48 = arith.addf %0, %47 : vector<8x128xf32>
    %cst_20 = arith.constant -0.138571098 : f32
    %49 = vector.broadcast %cst_20 : f32 to vector<8x128xf32>
    %50 = arith.divf %49, %48 : vector<8x128xf32>
    %51 = arith.addf %46, %50 : vector<8x128xf32>
    %cst_21 = arith.constant 7.000000e+00 : f32
    %52 = vector.broadcast %cst_21 : f32 to vector<8x128xf32>
    %53 = arith.addf %0, %52 : vector<8x128xf32>
    %cst_22 = arith.constant 9.98436917E-6 : f32
    %54 = vector.broadcast %cst_22 : f32 to vector<8x128xf32>
    %55 = arith.divf %54, %53 : vector<8x128xf32>
    %56 = arith.addf %51, %55 : vector<8x128xf32>
    %cst_23 = arith.constant 8.000000e+00 : f32
    %57 = vector.broadcast %cst_23 : f32 to vector<8x128xf32>
    %58 = arith.addf %0, %57 : vector<8x128xf32>
    %cst_24 = arith.constant 1.50563267E-7 : f32
    %59 = vector.broadcast %cst_24 : f32 to vector<8x128xf32>
    %60 = arith.divf %59, %58 : vector<8x128xf32>
    %61 = arith.addf %56, %60 : vector<8x128xf32>
    %cst_25 = arith.constant 2.900000e+01 : f32
    %62 = vector.broadcast %cst_25 : f32 to vector<8x128xf32>
    %63 = arith.addf %0, %62 : vector<8x128xf32>
    %cst_26 = arith.constant 1.000000e+00 : f32
    %64 = vector.broadcast %cst_26 : f32 to vector<8x128xf32>
    %65 = arith.addf %63, %64 : vector<8x128xf32>
    %cst_27 = arith.constant 1.000000e+00 : f32
    %66 = vector.broadcast %cst_27 : f32 to vector<8x128xf32>
    %67 = arith.mulf %66, %65 : vector<8x128xf32>
    %cst_28 = arith.constant 676.520386 : f32
    %68 = vector.broadcast %cst_28 : f32 to vector<8x128xf32>
    %69 = arith.addf %67, %68 : vector<8x128xf32>
    %cst_29 = arith.constant 1.000000e+00 : f32
    %70 = vector.broadcast %cst_29 : f32 to vector<8x128xf32>
    %71 = arith.mulf %70, %65 : vector<8x128xf32>
    %cst_30 = arith.constant 2.000000e+00 : f32
    %72 = vector.broadcast %cst_30 : f32 to vector<8x128xf32>
    %73 = arith.addf %63, %72 : vector<8x128xf32>
    %74 = arith.mulf %69, %73 : vector<8x128xf32>
    %cst_31 = arith.constant -1259.13916 : f32
    %75 = vector.broadcast %cst_31 : f32 to vector<8x128xf32>
    %76 = arith.mulf %75, %71 : vector<8x128xf32>
    %77 = arith.addf %74, %76 : vector<8x128xf32>
    %78 = arith.mulf %71, %73 : vector<8x128xf32>
    %cst_32 = arith.constant 3.000000e+00 : f32
    %79 = vector.broadcast %cst_32 : f32 to vector<8x128xf32>
    %80 = arith.addf %63, %79 : vector<8x128xf32>
    %81 = arith.mulf %77, %80 : vector<8x128xf32>
    %cst_33 = arith.constant 771.323425 : f32
    %82 = vector.broadcast %cst_33 : f32 to vector<8x128xf32>
    %83 = arith.mulf %82, %78 : vector<8x128xf32>
    %84 = arith.addf %81, %83 : vector<8x128xf32>
    %85 = arith.mulf %78, %80 : vector<8x128xf32>
    %cst_34 = arith.constant 4.000000e+00 : f32
    %86 = vector.broadcast %cst_34 : f32 to vector<8x128xf32>
    %87 = arith.addf %63, %86 : vector<8x128xf32>
    %88 = arith.mulf %84, %87 : vector<8x128xf32>
    %cst_35 = arith.constant -176.615036 : f32
    %89 = vector.broadcast %cst_35 : f32 to vector<8x128xf32>
    %90 = arith.mulf %89, %85 : vector<8x128xf32>
    %91 = arith.addf %88, %90 : vector<8x128xf32>
    %92 = arith.mulf %85, %87 : vector<8x128xf32>
    %cst_36 = arith.constant 5.000000e+00 : f32
    %93 = vector.broadcast %cst_36 : f32 to vector<8x128xf32>
    %94 = arith.addf %63, %93 : vector<8x128xf32>
    %95 = arith.mulf %91, %94 : vector<8x128xf32>
    %cst_37 = arith.constant 12.5073433 : f32
    %96 = vector.broadcast %cst_37 : f32 to vector<8x128xf32>
    %97 = arith.mulf %96, %92 : vector<8x128xf32>
    %98 = arith.addf %95, %97 : vector<8x128xf32>
    %99 = arith.mulf %92, %94 : vector<8x128xf32>
    %cst_38 = arith.constant 6.000000e+00 : f32
    %100 = vector.broadcast %cst_38 : f32 to vector<8x128xf32>
    %101 = arith.addf %63, %100 : vector<8x128xf32>
    %102 = arith.mulf %98, %101 : vector<8x128xf32>
    %cst_39 = arith.constant -0.138571098 : f32
    %103 = vector.broadcast %cst_39 : f32 to vector<8x128xf32>
    %104 = arith.mulf %103, %99 : vector<8x128xf32>
    %105 = arith.addf %102, %104 : vector<8x128xf32>
    %106 = arith.mulf %99, %101 : vector<8x128xf32>
    %cst_40 = arith.constant 7.000000e+00 : f32
    %107 = vector.broadcast %cst_40 : f32 to vector<8x128xf32>
    %108 = arith.addf %63, %107 : vector<8x128xf32>
    %109 = arith.mulf %105, %108 : vector<8x128xf32>
    %cst_41 = arith.constant 9.98436917E-6 : f32
    %110 = vector.broadcast %cst_41 : f32 to vector<8x128xf32>
    %111 = arith.mulf %110, %106 : vector<8x128xf32>
    %112 = arith.addf %109, %111 : vector<8x128xf32>
    %113 = arith.mulf %106, %108 : vector<8x128xf32>
    %cst_42 = arith.constant 8.000000e+00 : f32
    %114 = vector.broadcast %cst_42 : f32 to vector<8x128xf32>
    %115 = arith.addf %63, %114 : vector<8x128xf32>
    %116 = arith.mulf %112, %115 : vector<8x128xf32>
    %cst_43 = arith.constant 1.50563267E-7 : f32
    %117 = vector.broadcast %cst_43 : f32 to vector<8x128xf32>
    %118 = arith.mulf %117, %113 : vector<8x128xf32>
    %119 = arith.addf %116, %118 : vector<8x128xf32>
    %120 = arith.mulf %113, %115 : vector<8x128xf32>
    %121 = math.log %61 : vector<8x128xf32>
    %122 = arith.addf %20, %121 : vector<8x128xf32>
    %123 = math.log %119 : vector<8x128xf32>
    %124 = arith.subf %122, %123 : vector<8x128xf32>
    %125 = math.log %120 : vector<8x128xf32>
    %126 = arith.addf %124, %125 : vector<8x128xf32>
    %cst_44 = arith.constant 3.000000e+01 : f32
    %127 = vector.broadcast %cst_44 : f32 to vector<8x128xf32>
    %128 = arith.addf %127, %0 : vector<8x128xf32>
    %cst_45 = arith.constant 3.40119743 : f32
    %129 = vector.broadcast %cst_45 : f32 to vector<8x128xf32>
    %130 = arith.subf %4, %129 : vector<8x128xf32>
    %131 = arith.mulf %128, %130 : vector<8x128xf32>
    %cst_46 = arith.constant 3.40119743 : f32
    %132 = vector.broadcast %cst_46 : f32 to vector<8x128xf32>
    %133 = arith.subf %132, %7 : vector<8x128xf32>
    %134 = arith.mulf %0, %133 : vector<8x128xf32>
    %135 = arith.addf %131, %134 : vector<8x128xf32>
    %136 = arith.addf %126, %135 : vector<8x128xf32>
    %cst_47 = arith.constant 100.950188 : f32
    %137 = vector.broadcast %cst_47 : f32 to vector<8x128xf32>
    %138 = arith.addf %136, %137 : vector<8x128xf32>
    %cst_48 = arith.constant 3.40119743 : f32
    %139 = vector.broadcast %cst_48 : f32 to vector<8x128xf32>
    %140 = arith.subf %139, %4 : vector<8x128xf32>
    %cst_49 = arith.constant 3.000000e+01 : f32
    %141 = vector.broadcast %cst_49 : f32 to vector<8x128xf32>
    %142 = arith.mulf %141, %140 : vector<8x128xf32>
    %143 = math.exp %142 : vector<8x128xf32>
    %cst_50 = arith.constant 5.000000e-01 : f32
    %144 = vector.broadcast %cst_50 : f32 to vector<8x128xf32>
    %145 = arith.mulf %144, %143 : vector<8x128xf32>
    %cst_51 = arith.constant 5.000000e-01 : f32
    %146 = vector.broadcast %cst_51 : f32 to vector<8x128xf32>
    %147 = arith.addf %146, %145 : vector<8x128xf32>
    %cst_52 = arith.constant 1.000000e-10 : f32
    %148 = vector.broadcast %cst_52 : f32 to vector<8x128xf32>
    %149 = arith.addf %147, %148 : vector<8x128xf32>
    %150 = math.log %149 : vector<8x128xf32>
    %cst_53 = arith.constant 0.000000e+00 : f32
    %151 = vector.broadcast %cst_53 : f32 to vector<8x128xf32>
    %152 = arith.subf %151, %150 : vector<8x128xf32>
    %cst_54 = arith.constant 9.99999993E-9 : f32
    %153 = vector.broadcast %cst_54 : f32 to vector<8x128xf32>
    %154 = arith.cmpf ole, %0, %153 : vector<8x128xf32>
    %155 = arith.select %154, %152, %138 : vector<8x128xi1>, vector<8x128xf32>
    %c0_55 = arith.constant 0 : index
    %c0_56 = arith.constant 0 : index
    %c0_57 = arith.constant 0 : index
    %156 = vector.load %arg3[%c0_55, %c0_56, %c0_57] : memref<1x8x128xf32, #tpu.memory_space<vmem>>, vector<1x8x128xf32>
    %157 = vector.shape_cast %156 : vector<1x8x128xf32> to vector<8x128xf32>
    %158 = vector.shape_cast %155 : vector<8x128xf32> to vector<1x8x128xf32>
    tpu.vector_store %arg3[%c0_55, %c0_56, %c0_57], %158 {strides = array<i32>} : memref<1x8x128xf32, #tpu.memory_space<vmem>>, vector<1x8x128xf32>,
    return
  }
  func.func @transform_0(%arg0: i32) -> (i32, i32) {
    %c0_i32 = arith.constant 0 : i32
    %c0_i32_0 = arith.constant 0 : i32
    return %arg0, %c0_i32 : i32, i32
  }
  func.func @transform_1(%arg0: i32) -> (i32, i32) {
    %c0_i32 = arith.constant 0 : i32
    %c0_i32_0 = arith.constant 0 : i32
    return %arg0, %c0_i32 : i32, i32
  }
  func.func @transform_2(%arg0: i32) -> (i32, i32, i32) {
    %c0_i32 = arith.constant 0 : i32
    %c0_i32_0 = arith.constant 0 : i32
    %c0_i32_1 = arith.constant 0 : i32
    return %arg0, %c0_i32, %c0_i32_0 : i32, i32, i32
  }
}

</mosaic_0001>

<llo_original>
// kernel: tpu_custom_call.1
$region0: #{tpu_custom_call.1}
  #allocation0 [shape = 'u32[]', space=smem, size = 0x4, offset = 0x4, fixed_abs, tag = 'smem constant byte address 0x4 - core index']
  #allocation1 [shape = 'u32[72,128]{1,0:T(1,128)}', space=vmem, size = 0x9000, scoped, tag = 'internal scratch']
  %s0 = inlined_call_operand.hbm [shape: f32[16,128], index: 0, kind: input, shape index: {}]
  %s1 = inlined_call_operand.hbm [shape: f32[16,128], index: 1, kind: input, shape index: {}]
  %s2 = inlined_call_operand.hbm [shape: f32[2,8,128], index: 2, kind: output, shape index: {}]
  %s3 = sld [smem:[#allocation0]]
  $region49: #{tpu_custom_call.1} parent=0
    _
  %s5 = ssub.s32 1, %s3
  %s6 = scalar_select 0, %s5, %s3
  $region1: #{tpu_custom_call.1} parent=0
    #allocation2 [shape = 'u8[8192]{0}', space=vmem, size = 0x2000, scoped, tag = 'input window, operand 0']
    #allocation3 [shape = 's32[2]{0}', space=sflag, size = 0x8, scoped, tag = 'scoped memory for tpu_custom_call.1']
    #allocation4 [shape = 's32[2]{0}', space=sflag, size = 0x8, scoped, tag = 'scoped memory for tpu_custom_call.1']
    #allocation5 [shape = 'u8[8192]{0}', space=vmem, size = 0x2000, scoped, tag = 'input window, operand 1']
    #allocation6 [shape = 's32[2]{0}', space=sflag, size = 0x8, scoped, tag = 'scoped memory for tpu_custom_call.1']
    #allocation7 [shape = 'u8[8192]{0}', space=vmem, size = 0x2000, scoped, tag = 'output window, operand 0']
    %7 = vsyncpa [#allocation3], 0
    %s8 = scalar_lea.sflag [#allocation3], 1
    %9 = vsyncpa %s8, 0
    %10 = vsyncpa [#allocation6], 0
    %s11 = scalar_lea.sflag [#allocation6], 1
    %12 = vsyncpa %s11, 0
    %13 = vsyncpa [#allocation4], 0
    %s14 = scalar_lea.sflag [#allocation4], 1
    %15 = vsyncpa %s14, 0
    loop: start=0, step=1, limit=4
    $region2: #{tpu_custom_call.1} parent=1 // loop_pre_header
      _
    $region3: #{tpu_custom_call.1} parent=1 // loop_header
      %s17 = sphi 0, %s21
      %p18 = scmp.ge.s32.totalorder %s17, 4
      %s27 = sphi 0, %s29
      %s30 = sphi 0, %s27
      %s31 = sphi 0, %s30
      %s47 = sphi 0, %s31
      %s53 = sphi 0, %s55
      %s56 = sphi 0, %s53
      %s57 = sphi 0, %s56
      %s73 = sphi 0, %s57
      %s79 = sphi 0, %s81
      %s82 = sphi 0, %s79
      %s83 = sphi 0, %s82
      %s99 = sphi 0, %s83
    $region4: #{tpu_custom_call.1} parent=1 // loop_header_branch
      %20 = sbr.rel (%p18) target = $region8
    $region5: #{tpu_custom_call.1} parent=1 // loop_body
      %s22 = ssub.s32 %s17, 1
      %s23 = ssub.s32 %s17, 2
      %s24 = sadd.s32 %s17, 1
      %s25 = ssub.s32 %s17, %s24
      %p26 = scmp.eq.s32.totalorder %s25, 0
      %s28 = sadd.s32 %s27, 1
      %s29 = scalar_select %p26, %s27, %s28
      %p32 = pneg %p26
      %p33 = scmp.eq.s32.totalorder %s17, 1
      %p34 = por %p32, %p33
      %p35 = scmp.ne.s32.totalorder %s27, %s30
      %p36 = scmp.eq.s32.totalorder %s17, 0
      %p37 = por %p35, %p36
      %p38 = scmp.ne.s32.totalorder %s27, %s30
      %p39 = scmp.eq.s32.totalorder %s22, 1
      %p40 = por %p38, %p39
      %p41 = scmp.ne.s32.totalorder %s30, %s31
      %p42 = scmp.eq.s32.totalorder %s22, 0
      %p43 = por %p41, %p42
      %p44 = scmp.ne.s32.totalorder %s30, %s31
      %p45 = scmp.eq.s32.totalorder %s23, 1
      %p46 = por %p44, %p45
      %p48 = scmp.ne.s32.totalorder %s31, %s47
      %p49 = scmp.eq.s32.totalorder %s23, 0
      %p50 = por %p48, %p49
      %s51 = ssub.s32 %s17, %s24
      %p52 = scmp.eq.s32.totalorder %s51, 0
      %s54 = sadd.s32 %s53, 1
      %s55 = scalar_select %p52, %s53, %s54
      %p58 = pneg %p52
      %p59 = scmp.eq.s32.totalorder %s17, 1
      %p60 = por %p58, %p59
      %p61 = scmp.ne.s32.totalorder %s53, %s56
      %p62 = scmp.eq.s32.totalorder %s17, 0
      %p63 = por %p61, %p62
      %p64 = scmp.ne.s32.totalorder %s53, %s56
      %p65 = scmp.eq.s32.totalorder %s22, 1
      %p66 = por %p64, %p65
      %p67 = scmp.ne.s32.totalorder %s56, %s57
      %p68 = scmp.eq.s32.totalorder %s22, 0
      %p69 = por %p67, %p68
      %p70 = scmp.ne.s32.totalorder %s56, %s57
      %p71 = scmp.eq.s32.totalorder %s23, 1
      %p72 = por %p70, %p71
      %p74 = scmp.ne.s32.totalorder %s57, %s73
      %p75 = scmp.eq.s32.totalorder %s23, 0
      %p76 = por %p74, %p75
      %s77 = ssub.s32 %s17, %s24
      %p78 = scmp.eq.s32.totalorder %s77, 0
      %s80 = sadd.s32 %s79, 1
      %s81 = scalar_select %p78, %s79, %s80
      %p84 = pneg %p78
      %p85 = scmp.eq.s32.totalorder %s17, 1
      %p86 = por %p84, %p85
      %p87 = scmp.ne.s32.totalorder %s79, %s82
      %p88 = scmp.eq.s32.totalorder %s17, 0
      %p89 = por %p87, %p88
      %p90 = scmp.ne.s32.totalorder %s79, %s82
      %p91 = scmp.eq.s32.totalorder %s22, 1
      %p92 = por %p90, %p91
      %p93 = scmp.ne.s32.totalorder %s82, %s83
      %p94 = scmp.eq.s32.totalorder %s22, 0
      %p95 = por %p93, %p94
      %p96 = scmp.ne.s32.totalorder %s82, %s83
      %p97 = scmp.eq.s32.totalorder %s23, 1
      %p98 = por %p96, %p97
      %p100 = scmp.ne.s32.totalorder %s83, %s99
      %p101 = scmp.eq.s32.totalorder %s23, 0
      %p102 = por %p100, %p101
      %p103 = scmp.le.s32.totalorder 1, %s17
      %p104 = scmp.lt.s32.totalorder %s17, 3
      %p105 = pnand %p103, %p104
      %p106 = pneg %p105
      // Predicated region
      $region9: #{tpu_custom_call.1} parent=5 // pred_check
        _
      $region10: #{tpu_custom_call.1} parent=5 // pred_check_branch
        %108 = sbr.rel (%p105) target = $region12
      $region11: #{tpu_custom_call.1} parent=5 // pred_region
        %s109 = ssub.s32 %s17, 1
      $region12: #{tpu_custom_call.1} parent=5 // pred_fallthru
        _
      %p110 = scmp.lt.s32.totalorder %s17, 2
      // Predicated region
      $region13: #{tpu_custom_call.1} parent=5 // pred_check
        %p111 = pneg %p110
      $region14: #{tpu_custom_call.1} parent=5 // pred_check_branch
        %113 = sbr.rel (%p111) target = $region16
      $region15: #{tpu_custom_call.1} parent=5 // pred_region
        // Predicated region
        $region17: #{tpu_custom_call.1} parent=15 // pred_check
          %p114 = pneg %p37
        $region18: #{tpu_custom_call.1} parent=15 // pred_check_branch
          %116 = sbr.rel (%p114) target = $region20
        $region19: #{tpu_custom_call.1} parent=15 // pred_region
          %s117 = sand.u32 %s27, 1
          %s118 = scalar_lea.sflag [#allocation3], %s117
          %s119 = sand.u32 %s27, 1
          %s120 = smul.addr %s119, 8
          %s121 = scalar_lea.vmem [#allocation2], %s120
          %123 = vsyncadd %s118, 0
          %s124 = smul.addr %s17, 8
          %s125 = scalar_lea.hbm %s0, %s124
          %s127 = sshll.u32 %s125, 4
          %s128 = int_to_ptr.hbm [resolvable:$true] %s127
          %s129 = sshll.u32 %s121, 4
          %s130 = int_to_ptr.vmem [resolvable:$true] %s129
          %132 = dma.hbm_to_vmem [thread:$0]  %s128, 128, %s130, %s118
        $region20: #{tpu_custom_call.1} parent=15 // pred_fallthru
          _
        // Predicated region
        $region21: #{tpu_custom_call.1} parent=15 // pred_check
          %p133 = pneg %p63
        $region22: #{tpu_custom_call.1} parent=15 // pred_check_branch
          %135 = sbr.rel (%p133) target = $region24
        $region23: #{tpu_custom_call.1} parent=15 // pred_region
          %s136 = sand.u32 %s53, 1
          %s137 = scalar_lea.sflag [#allocation6], %s136
          %s138 = sand.u32 %s53, 1
          %s139 = smul.addr %s138, 8
          %s140 = scalar_lea.vmem [#allocation5], %s139
          %142 = vsyncadd %s137, 0
          %s143 = smul.addr %s17, 8
          %s144 = scalar_lea.hbm %s1, %s143
          %s146 = sshll.u32 %s144, 4
          %s147 = int_to_ptr.hbm [resolvable:$true] %s146
          %s148 = sshll.u32 %s140, 4
          %s149 = int_to_ptr.vmem [resolvable:$true] %s148
          %151 = dma.hbm_to_vmem [thread:$0]  %s147, 128, %s149, %s137
        $region24: #{tpu_custom_call.1} parent=15 // pred_fallthru
          _
      $region16: #{tpu_custom_call.1} parent=5 // pred_fallthru
        _
      %p152 = scmp.le.s32.totalorder 1, %s17
      %p153 = scmp.lt.s32.totalorder %s17, 3
      %p154 = pnand %p152, %p153
      %p155 = pneg %p154
      // Predicated region
      $region25: #{tpu_custom_call.1} parent=5 // pred_check
        _
      $region26: #{tpu_custom_call.1} parent=5 // pred_check_branch
        %157 = sbr.rel (%p154) target = $region28
      $region27: #{tpu_custom_call.1} parent=5 // pred_region
        %s158 = ssub.s32 %s17, 1
        %s159 = sand.u32 %s30, 1
        %s160 = scalar_lea.sflag [#allocation3], %s159
        %s161 = sand.u32 %s30, 1
        %s162 = smul.addr %s161, 8
        %s163 = scalar_lea.vmem [#allocation2], %s162
        // Predicated region
        $region29: #{tpu_custom_call.1} parent=27 // pred_check
          %p164 = pneg %p43
        $region30: #{tpu_custom_call.1} parent=27 // pred_check_branch
          %166 = sbr.rel (%p164) target = $region32
        $region31: #{tpu_custom_call.1} parent=27 // pred_region
          %168 = dma.done %s160, 128
        $region32: #{tpu_custom_call.1} parent=27 // pred_fallthru
          _
        %s169 = sand.u32 %s56, 1
        %s170 = scalar_lea.sflag [#allocation6], %s169
        %s171 = sand.u32 %s56, 1
        %s172 = smul.addr %s171, 8
        %s173 = scalar_lea.vmem [#allocation5], %s172
        // Predicated region
        $region33: #{tpu_custom_call.1} parent=27 // pred_check
          %p174 = pneg %p69
        $region34: #{tpu_custom_call.1} parent=27 // pred_check_branch
          %176 = sbr.rel (%p174) target = $region36
        $region35: #{tpu_custom_call.1} parent=27 // pred_region
          %178 = dma.done %s170, 128
        $region36: #{tpu_custom_call.1} parent=27 // pred_fallthru
          _
        %s179 = sand.u32 %s30, 1
        %s180 = scalar_lea.sflag [#allocation3], %s179
        %s181 = sand.u32 %s30, 1
        %s182 = smul.addr %s181, 8
        %s183 = scalar_lea.vmem [#allocation2], %s182
        %p184 = pneg %p43
        %p185 = pneg %p40
        %s186 = sand.u32 %s56, 1
        %s187 = scalar_lea.sflag [#allocation6], %s186
        %s188 = sand.u32 %s56, 1
        %s189 = smul.addr %s188, 8
        %s190 = scalar_lea.vmem [#allocation5], %s189
        %p191 = pneg %p69
        %p192 = pneg %p66
        %p193 = pneg %p95
        %p194 = pneg %p92
        %s195 = sand.u32 %s82, 1
        %s196 = scalar_lea.sflag [#allocation4], %s195
        %s197 = sand.u32 %s82, 1
        %s198 = smul.addr %s197, 8
        %s199 = scalar_lea.vmem [#allocation7], %s198
        %v200 = vld [vmem:[%s163] sm:$0xff]
        %v201 = vld [vmem:[%s173] sm:$0xff]
        %v202 = vadd.f32 %v201, 30.0
        %v203 = vlog2.pop %v202
        %v204 = vmul.f32 %v203, 0.6931472
        %v205 = vadd.f32 %v201, 1e-10
        %v206 = vlog2.pop %v205
        %v207 = vmul.f32 %v206, 0.6931472
        %v208 = vadd.f32 %v200, 0.5
        %v209 = vadd.f32 %v200, 7.5
        %v210 = vlog2.pop %v209
        %v211 = vmul.f32 %v210, 0.6931472
        %v212 = vmul.f32 %v208, %v211
        %v213 = vadd.f32 %v200, 29.5
        %v214 = vadd.f32 %v200, 36.5
        %v215 = vlog2.pop %v214
        %v216 = vmul.f32 %v215, 0.6931472
        %v217 = vmul.f32 %v213, %v216
        %v218 = vsub.f32 %v212, %v217
        %v219 = vadd.f32 %v200, 1.0
        %v220 = vrcp.pop %v219
        %v221 = vmul.f32 %v219, %v220
        %v222 = vsub.f32 1.0, %v221
        %v223 = vmul.f32 %v220, %v222
        %v224 = vadd.f32 %v220, %v223
        %vm225 = vweird.f32 %v219
        %vm226 = vweird.f32 %v220
        %vm227 = vmor %vm225, %vm226
        %v228 = vsel %vm227, %v220, %v224
        %v229 = vand.u32 2147483647, %v219
        %vm230 = vcmp.eq.f32.partialorder %v229, 8.507059e+37
        %v231 = vand.u32 %v219, 2147483648
        %v232 = vor.u32 1.1754944e-38, %v231
        %v233 = vsel %vm230, %v232, %v228
        %v234 = vmul.f32 676.5204, %v233
        %v235 = vadd.f32 %v234, 1.0
        %v236 = vadd.f32 %v200, 2.0
        %v237 = vrcp.pop %v236
        %v238 = vmul.f32 %v236, %v237
        %v239 = vsub.f32 1.0, %v238
        %v240 = vmul.f32 %v237, %v239
        %v241 = vadd.f32 %v237, %v240
        %vm242 = vweird.f32 %v236
        %vm243 = vweird.f32 %v237
        %vm244 = vmor %vm242, %vm243
        %v245 = vsel %vm244, %v237, %v241
        %v246 = vand.u32 2147483647, %v236
        %vm247 = vcmp.eq.f32.partialorder %v246, 8.507059e+37
        %v248 = vand.u32 %v236, 2147483648
        %v249 = vor.u32 1.1754944e-38, %v248
        %v250 = vsel %vm247, %v249, %v245
        %v251 = vmul.f32 -1259.1392, %v250
        %v252 = vadd.f32 %v235, %v251
        %v253 = vadd.f32 %v200, 3.0
        %v254 = vrcp.pop %v253
        %v255 = vmul.f32 %v253, %v254
        %v256 = vsub.f32 1.0, %v255
        %v257 = vmul.f32 %v254, %v256
        %v258 = vadd.f32 %v254, %v257
        %vm259 = vweird.f32 %v253
        %vm260 = vweird.f32 %v254
        %vm261 = vmor %vm259, %vm260
        %v262 = vsel %vm261, %v254, %v258
        %v263 = vand.u32 2147483647, %v253
        %vm264 = vcmp.eq.f32.partialorder %v263, 8.507059e+37
        %v265 = vand.u32 %v253, 2147483648
        %v266 = vor.u32 1.1754944e-38, %v265
        %v267 = vsel %vm264, %v266, %v262
        %v268 = vmul.f32 771.3234, %v267
        %v269 = vadd.f32 %v252, %v268
        %v270 = vadd.f32 %v200, 4.0
        %v271 = vrcp.pop %v270
        %v272 = vmul.f32 %v270, %v271
        %v273 = vsub.f32 1.0, %v272
        %v274 = vmul.f32 %v271, %v273
        %v275 = vadd.f32 %v271, %v274
        %vm276 = vweird.f32 %v270
        %vm277 = vweird.f32 %v271
        %vm278 = vmor %vm276, %vm277
        %v279 = vsel %vm278, %v271, %v275
        %v280 = vand.u32 2147483647, %v270
        %vm281 = vcmp.eq.f32.partialorder %v280, 8.507059e+37
        %v282 = vand.u32 %v270, 2147483648
        %v283 = vor.u32 1.1754944e-38, %v282
        %v284 = vsel %vm281, %v283, %v279
        %v285 = vmul.f32 -176.61504, %v284
        %v286 = vadd.f32 %v269, %v285
        %v287 = vadd.f32 %v200, 5.0
        %v288 = vrcp.pop %v287
        %v289 = vmul.f32 %v287, %v288
        %v290 = vsub.f32 1.0, %v289
        %v291 = vmul.f32 %v288, %v290
        %v292 = vadd.f32 %v288, %v291
        %vm293 = vweird.f32 %v287
        %vm294 = vweird.f32 %v288
        %vm295 = vmor %vm293, %vm294
        %v296 = vsel %vm295, %v288, %v292
        %v297 = vand.u32 2147483647, %v287
        %vm298 = vcmp.eq.f32.partialorder %v297, 8.507059e+37
        %v299 = vand.u32 %v287, 2147483648
        %v300 = vor.u32 1.1754944e-38, %v299
        %v301 = vsel %vm298, %v300, %v296
        %v302 = vmul.f32 12.507343, %v301
        %v303 = vadd.f32 %v286, %v302
        %v304 = vadd.f32 %v200, 6.0
        %v305 = vrcp.pop %v304
        %v306 = vmul.f32 %v304, %v305
        %v307 = vsub.f32 1.0, %v306
        %v308 = vmul.f32 %v305, %v307
        %v309 = vadd.f32 %v305, %v308
        %vm310 = vweird.f32 %v304
        %vm311 = vweird.f32 %v305
        %vm312 = vmor %vm310, %vm311
        %v313 = vsel %vm312, %v305, %v309
        %v314 = vand.u32 2147483647, %v304
        %vm315 = vcmp.eq.f32.partialorder %v314, 8.507059e+37
        %v316 = vand.u32 %v304, 2147483648
        %v317 = vor.u32 1.1754944e-38, %v316
        %v318 = vsel %vm315, %v317, %v313
        %v319 = vmul.f32 -0.1385711, %v318
        %v320 = vadd.f32 %v303, %v319
        %v321 = vadd.f32 %v200, 7.0
        %v322 = vrcp.pop %v321
        %v323 = vmul.f32 %v321, %v322
        %v324 = vsub.f32 1.0, %v323
        %v325 = vmul.f32 %v322, %v324
        %v326 = vadd.f32 %v322, %v325
        %vm327 = vweird.f32 %v321
        %vm328 = vweird.f32 %v322
        %vm329 = vmor %vm327, %vm328
        %v330 = vsel %vm329, %v322, %v326
        %v331 = vand.u32 2147483647, %v321
        %vm332 = vcmp.eq.f32.partialorder %v331, 8.507059e+37
        %v333 = vand.u32 %v321, 2147483648
        %v334 = vor.u32 1.1754944e-38, %v333
        %v335 = vsel %vm332, %v334, %v330
        %v336 = vmul.f32 9.984369e-06, %v335
        %v337 = vadd.f32 %v320, %v336
        %v338 = vadd.f32 %v200, 8.0
        %v339 = vrcp.pop %v338
        %v340 = vmul.f32 %v338, %v339
        %v341 = vsub.f32 1.0, %v340
        %v342 = vmul.f32 %v339, %v341
        %v343 = vadd.f32 %v339, %v342
        %vm344 = vweird.f32 %v338
        %vm345 = vweird.f32 %v339
        %vm346 = vmor %vm344, %vm345
        %v347 = vsel %vm346, %v339, %v343
        %v348 = vand.u32 2147483647, %v338
        %vm349 = vcmp.eq.f32.partialorder %v348, 8.507059e+37
        %v350 = vand.u32 %v338, 2147483648
        %v351 = vor.u32 1.1754944e-38, %v350
        %v352 = vsel %vm349, %v351, %v347
        %v353 = vmul.f32 1.5056327e-07, %v352
        %v354 = vadd.f32 %v337, %v353
        %v355 = vadd.f32 %v200, 29.0
        %v356 = vadd.f32 %v355, 1.0
        %v357 = vadd.f32 %v356, 676.5204
        %v358 = vadd.f32 %v355, 2.0
        %v359 = vmul.f32 %v357, %v358
        %v360 = vmul.f32 %v356, -1259.1392
        %v361 = vadd.f32 %v359, %v360
        %v362 = vmul.f32 %v356, %v358
        %v363 = vadd.f32 %v355, 3.0
        %v364 = vmul.f32 %v361, %v363
        %v365 = vmul.f32 %v362, 771.3234
        %v366 = vadd.f32 %v364, %v365
        %v367 = vmul.f32 %v362, %v363
        %v368 = vadd.f32 %v355, 4.0
        %v369 = vmul.f32 %v366, %v368
        %v370 = vmul.f32 %v367, -176.61504
        %v371 = vadd.f32 %v369, %v370
        %v372 = vmul.f32 %v367, %v368
        %v373 = vadd.f32 %v355, 5.0
        %v374 = vmul.f32 %v371, %v373
        %v375 = vmul.f32 %v372, 12.507343
        %v376 = vadd.f32 %v374, %v375
        %v377 = vmul.f32 %v372, %v373
        %v378 = vadd.f32 %v355, 6.0
        %v379 = vmul.f32 %v376, %v378
        %v380 = vmul.f32 %v377, -0.1385711
        %v381 = vadd.f32 %v379, %v380
        %v382 = vmul.f32 %v377, %v378
        %v383 = vadd.f32 %v355, 7.0
        %v384 = vmul.f32 %v381, %v383
        %v385 = vmul.f32 %v382, 9.984369e-06
        %v386 = vadd.f32 %v384, %v385
        %v387 = vmul.f32 %v382, %v383
        %v388 = vadd.f32 %v355, 8.0
        %v389 = vmul.f32 %v386, %v388
        %v390 = vmul.f32 %v387, 1.5056327e-07
        %v391 = vadd.f32 %v389, %v390
        %v392 = vmul.f32 %v387, %v388
        %v393 = vlog2.pop %v354
        %v394 = vmul.f32 %v393, 0.6931472
        %v395 = vadd.f32 %v218, %v394
        %v396 = vlog2.pop %v391
        %v397 = vmul.f32 %v396, 0.6931472
        %v398 = vsub.f32 %v395, %v397
        %v399 = vlog2.pop %v392
        %v400 = vmul.f32 %v399, 0.6931472
        %v401 = vadd.f32 %v398, %v400
        %v402 = vadd.f32 %v200, 30.0
        %v403 = vsub.f32 %v204, 3.4011974
        %v404 = vmul.f32 %v402, %v403
        %v405 = vsub.f32 3.4011974, %v207
        %v406 = vmul.f32 %v200, %v405
        %v407 = vadd.f32 %v404, %v406
        %v408 = vadd.f32 %v401, %v407
        %v409 = vadd.f32 %v408, 100.95019
        %v410 = vsub.f32 3.4011974, %v204
        %v411 = vmul.f32 %v410, 30.0
        %v412 = vmul.f32 %v411, 1.442695
        %v413 = vpow.pop %v412
        %v414 = vmul.f32 %v413, 0.5
        %v415 = vadd.f32 %v414, 0.5
        %v416 = vadd.f32 %v415, 1e-10
        %v417 = vlog2.pop %v416
        %v418 = vmul.f32 %v417, 0.6931472
        %v419 = vsub.f32 0.0, %v418
        %vm420 = vcmp.le.f32.partialorder %v200, 1e-08
        %v421 = vsel %vm420, %v419, %v409
        %422 = vst [vmem:[%s199] sm:$0xff] %v421
        %s423 = sand.u32 %s82, 1
        %s424 = scalar_lea.sflag [#allocation4], %s423
        %s425 = sand.u32 %s82, 1
        %s426 = smul.addr %s425, 8
        %s427 = scalar_lea.vmem [#allocation7], %s426
        // Predicated region
        $region37: #{tpu_custom_call.1} parent=27 // pred_check
          %p428 = pneg %p92
        $region38: #{tpu_custom_call.1} parent=27 // pred_check_branch
          %430 = sbr.rel (%p428) target = $region40
        $region39: #{tpu_custom_call.1} parent=27 // pred_region
          %432 = vsyncadd %s424, 0
          %s433 = smul.addr %s22, 8
          %s434 = scalar_lea.hbm %s2, %s433
          %s436 = sshll.u32 %s427, 4
          %s437 = int_to_ptr.vmem [resolvable:$true] %s436
          %s438 = sshll.u32 %s434, 4
          %s439 = int_to_ptr.hbm [resolvable:$true] %s438
          %441 = dma.vmem_to_hbm [thread:$0]  %s437, 128, %s439, %s424
        $region40: #{tpu_custom_call.1} parent=27 // pred_fallthru
          _
      $region28: #{tpu_custom_call.1} parent=5 // pred_fallthru
        _
      %p442 = scmp.le.s32.totalorder 2, %s17
      // Predicated region
      $region41: #{tpu_custom_call.1} parent=5 // pred_check
        %p443 = pneg %p442
      $region42: #{tpu_custom_call.1} parent=5 // pred_check_branch
        %445 = sbr.rel (%p443) target = $region44
      $region43: #{tpu_custom_call.1} parent=5 // pred_region
        %s446 = ssub.s32 %s17, 2
        // Predicated region
        $region45: #{tpu_custom_call.1} parent=43 // pred_check
          %p447 = pneg %p98
        $region46: #{tpu_custom_call.1} parent=43 // pred_check_branch
          %449 = sbr.rel (%p447) target = $region48
        $region47: #{tpu_custom_call.1} parent=43 // pred_region
          %s450 = sand.u32 %s83, 1
          %s451 = scalar_lea.sflag [#allocation4], %s450
          %s452 = sand.u32 %s83, 1
          %s453 = smul.addr %s452, 8
          %s454 = scalar_lea.vmem [#allocation7], %s453
          %456 = dma.done %s451, 128
        $region48: #{tpu_custom_call.1} parent=43 // pred_fallthru
          _
      $region44: #{tpu_custom_call.1} parent=5 // pred_fallthru
        _
    $region6: #{tpu_custom_call.1} parent=1 // loop_footer
      %s21 = sadd.s32 1, %s17
    $region7: #{tpu_custom_call.1} parent=1 // loop_footer_branch
      %16 = sbr.rel target = $region3
    $region8: #{tpu_custom_call.1} parent=1 // loop_exit
      _
    %457 = vsyncpa [#allocation3], 1
    %s458 = scalar_lea.sflag [#allocation3], 1
    %459 = vsyncpa %s458, 1
    %460 = vsyncpa [#allocation6], 1
    %s461 = scalar_lea.sflag [#allocation6], 1
    %462 = vsyncpa %s461, 1
    %463 = vsyncpa [#allocation4], 1
    %s464 = scalar_lea.sflag [#allocation4], 1
    %465 = vsyncpa %s464, 1

</llo_original>
